<compile_context>
chip_gen: v5e
topology: v5e:2x2
jax: 0.10.0
libtpu: 0.0.40
codegen_flags: <defaults>
</compile_context>

<pallas_src>
import functools

import jax
import jax.numpy as jnp
from jax.experimental import pallas as pl
from jax.experimental.pallas import tpu as pltpu


def embeddings_kernel(patches_ref, w_ref, b_ref, cls_ref, pos_ref, o_ref,
                      *, B, N, S):
    # patches_ref: (B*N, Pd)  flattened patches, batch folded into M
    # w_ref:       (Pd, D)    Conv2d kernel as a dense projection
    # b_ref:       (1, D)     Conv2d bias
    # cls_ref:     (1, D)     CLS token
    # pos_ref:     (S, D)     position embeddings, S = N + 1
    # o_ref:       (B*S, D)
    proj = jnp.dot(patches_ref[...], w_ref[...],
                   preferred_element_type=jnp.float32)        # single MXU matmul

    pos = pos_ref[...].astype(jnp.float32)                    # (S, D)
    # Fuse the Conv2d bias into the patch-row position add: computed once,
    # reused for every batch (saves a (B*N, D)-wide add).
    patch_add = pos[1:, :] + b_ref[...].astype(jnp.float32)   # (N, D)
    cls_row = (cls_ref[...].astype(jnp.float32) + pos[0:1, :]).astype(o_ref.dtype)

    # B is tiny and static: unrolled, all-static slices, no concatenate/relayout.
    for b in range(B):
        o_ref[b * S:b * S + 1, :] = cls_row
        o_ref[b * S + 1:(b + 1) * S, :] = (
            proj[b * N:(b + 1) * N, :] + patch_add
        ).astype(o_ref.dtype)
    # Dropout: eval mode -> identity (no stochastic path in this forward).


def vit_embeddings_forward(x, params, *, patch_size):
    B, C, H, W = x.shape
    P = patch_size
    nh, nw = H // P, W // P
    N = nh * nw
    D = params["conv_w"].shape[0]
    S = N + 1
    Pd = C * P * P

    # ---- wrapper-side layout plumbing (no compute) ----
    # Non-overlapping PxP patches flattened in (C, ph, pw) order -> (B*N, C*P*P).
    patches = (
        x.reshape(B, C, nh, P, nw, P)
         .transpose(0, 2, 4, 1, 3, 5)
         .reshape(B * N, Pd)
    )
    # Conv2d(kernel=stride=P) weight (D, C, P, P) -> dense (C*P*P, D).
    w = params["conv_w"].reshape(D, Pd).T
    b = params["conv_b"].reshape(1, D)
    cls = params["cls"].reshape(1, D)
    pos = params["pos"].reshape(S, D)

    kernel = functools.partial(embeddings_kernel, B=B, N=N, S=S)

    cost = pl.CostEstimate(
        flops=2 * (B * N) * Pd * D + 2 * B * S * D,
        transcendentals=0,
        bytes_accessed=4 * (B * N * Pd + Pd * D + D + D + S * D + B * S * D),
    )

    out2d = pl.pallas_call(
        kernel,
        out_shape=jax.ShapeDtypeStruct((B * S, D), x.dtype),
        grid=(1,),  # batch folded into one step: per-step overhead dominates at these sizes
        in_specs=[
            pl.BlockSpec((B * N, Pd), lambda i: (0, 0)),   # patches
            pl.BlockSpec((Pd, D), lambda i: (0, 0)),       # projection weight
            pl.BlockSpec((1, D), lambda i: (0, 0)),        # projection bias
            pl.BlockSpec((1, D), lambda i: (0, 0)),        # cls token
            pl.BlockSpec((S, D), lambda i: (0, 0)),        # position embeddings
        ],
        out_specs=pl.BlockSpec((B * S, D), lambda i: (0, 0)),
        compiler_params=pltpu.CompilerParams(dimension_semantics=("arbitrary",)),
        cost_estimate=cost,
    )(patches, w, b, cls, pos)

    # TODO(synk): at production sizes (large B/N, D>=768) add a "parallel" grid
    # axis over patch-row tiles so v7x's two TensorCores are both used and VMEM
    # tiles stay within the 64 MiB budget.
    return out2d.reshape(B, S, D)


def reference_forward(x, params, *, patch_size):
    # Pure-JAX reference mirroring the PyTorch Embeddings module (eval mode).
    B, C, H, W = x.shape
    P = patch_size
    D = params["conv_w"].shape[0]
    proj = jax.lax.conv_general_dilated(
        x, params["conv_w"], window_strides=(P, P), padding="VALID",
        dimension_numbers=("NCHW", "OIHW", "NCHW"))
    proj = proj + params["conv_b"].reshape(1, D, 1, 1)
    proj = proj.reshape(B, D, -1).transpose(0, 2, 1)       # flatten(2).transpose(1, 2)
    cls = jnp.broadcast_to(params["cls"], (B, 1, D))
    out = jnp.concatenate([cls, proj], axis=1) + params["pos"]
    return out                                             # dropout = identity


if __name__ == "__main__":
    # Config: image_size=16, patch_size=4, num_channels=4, hidden_size=32
    B, C, IMG, P, D = 2, 4, 16, 4, 32
    N = (IMG // P) ** 2
    S = N + 1

    key = jax.random.PRNGKey(0)
    k = jax.random.split(key, 5)
    params = {
        "conv_w": (0.05 * jax.random.normal(k[0], (D, C, P, P))).astype(jnp.float32),
        "conv_b": (0.05 * jax.random.normal(k[1], (D,))).astype(jnp.float32),
        "cls":    jax.random.normal(k[2], (1, 1, D), dtype=jnp.float32),
        "pos":    jax.random.normal(k[3], (1, S, D), dtype=jnp.float32),
    }
    x = jax.random.normal(k[4], (B, C, IMG, IMG), dtype=jnp.float32)

    out = vit_embeddings_forward(x, params, patch_size=P)
    out = jax.block_until_ready(out)

    ref = reference_forward(x, params, patch_size=P)
    assert out.shape == (B, S, D)
    assert jnp.allclose(out, ref, atol=1e-4, rtol=1e-4), "mismatch vs reference"

    print("KERNEL_OK")
</pallas_src>

<mosaic_0001>
module attributes {stable_mosaic.version = 11 : i64} {
  func.func @embeddings_kernel(%arg0: i32, %arg1: memref<32x64xf32, #tpu.memory_space<vmem>>, %arg2: memref<64x32xf32, #tpu.memory_space<vmem>>, %arg3: memref<1x32xf32, #tpu.memory_space<vmem>>, %arg4: memref<1x32xf32, #tpu.memory_space<vmem>>, %arg5: memref<17x32xf32, #tpu.memory_space<vmem>>, %arg6: memref<34x32xf32, #tpu.memory_space<vmem>>) attributes {dimension_semantics = [#tpu.dimension_semantics<arbitrary>], iteration_bounds = array<i64: 1>, scalar_prefetch = 0 : i64, scratch_operands = 0 : i64, tpu.core_type = #tpu.core_type<tc>, window_params = [{pipeline_mode = #tpu.pipeline_mode<synchronous>, transform_indices = @transform_0, window_bounds = array<i64: 32, 64>}, {pipeline_mode = #tpu.pipeline_mode<synchronous>, transform_indices = @transform_1, window_bounds = array<i64: 64, 32>}, {pipeline_mode = #tpu.pipeline_mode<synchronous>, transform_indices = @transform_2, window_bounds = array<i64: 1, 32>}, {pipeline_mode = #tpu.pipeline_mode<synchronous>, transform_indices = @transform_3, window_bounds = array<i64: 1, 32>}, {pipeline_mode = #tpu.pipeline_mode<synchronous>, transform_indices = @transform_4, window_bounds = array<i64: 17, 32>}, {pipeline_mode = #tpu.pipeline_mode<synchronous>, transform_indices = @transform_5, window_bounds = array<i64: 34, 32>}]} {
    %c0 = arith.constant 0 : index
    %c0_0 = arith.constant 0 : index
    %0 = vector.load %arg1[%c0, %c0_0] : memref<32x64xf32, #tpu.memory_space<vmem>>, vector<32x64xf32>
    %c0_1 = arith.constant 0 : index
    %c0_2 = arith.constant 0 : index
    %1 = vector.load %arg2[%c0_1, %c0_2] : memref<64x32xf32, #tpu.memory_space<vmem>>, vector<64x32xf32>
    %cst = arith.constant dense<0.000000e+00> : vector<32x32xf32>
    %2 = tpu.matmul %0, %1, %cst {dimension_numbers = #tpu.dot_dimension_numbers<[1], [0], [0], [1], [0, 0, 1, 1], [], []>} : vector<32x64xf32>, vector<64x32xf32>, vector<32x32xf32> -> vector<32x32xf32>
    %c0_3 = arith.constant 0 : index
    %c0_4 = arith.constant 0 : index
    %3 = vector.load %arg5[%c0_3, %c0_4] : memref<17x32xf32, #tpu.memory_space<vmem>>, vector<17x32xf32>
    %4 = vector.extract_strided_slice %3 {offsets = [1, 0], sizes = [16, 32], strides = [1, 1]} : vector<17x32xf32> to vector<16x32xf32>
    %c0_5 = arith.constant 0 : index
    %c0_6 = arith.constant 0 : index
    %5 = vector.load %arg3[%c0_5, %c0_6] : memref<1x32xf32, #tpu.memory_space<vmem>>, vector<1x32xf32>
    %6 = vector.broadcast %5 : vector<1x32xf32> to vector<16x32xf32>
    %7 = arith.addf %4, %6 : vector<16x32xf32>
    %c0_7 = arith.constant 0 : index
    %c0_8 = arith.constant 0 : index
    %8 = vector.load %arg4[%c0_7, %c0_8] : memref<1x32xf32, #tpu.memory_space<vmem>>, vector<1x32xf32>
    %9 = vector.extract_strided_slice %3 {offsets = [0, 0], sizes = [1, 32], strides = [1, 1]} : vector<17x32xf32> to vector<1x32xf32>
    %10 = arith.addf %8, %9 : vector<1x32xf32>
    %c0_9 = arith.constant 0 : index
    %c0_10 = arith.constant 0 : index
    %11 = vector.load %arg6[%c0_9, %c0_10] : memref<34x32xf32, #tpu.memory_space<vmem>>, vector<1x32xf32>
    tpu.vector_store %arg6[%c0_9, %c0_10], %10 {strides = array<i32>} : memref<34x32xf32, #tpu.memory_space<vmem>>, vector<1x32xf32>,
    %12 = vector.extract_strided_slice %2 {offsets = [0, 0], sizes = [16, 32], strides = [1, 1]} : vector<32x32xf32> to vector<16x32xf32>
    %13 = arith.addf %12, %7 : vector<16x32xf32>
    %c1 = arith.constant 1 : index
    %c0_11 = arith.constant 0 : index
    %14 = vector.load %arg6[%c1, %c0_11] : memref<34x32xf32, #tpu.memory_space<vmem>>, vector<16x32xf32>
    tpu.vector_store %arg6[%c1, %c0_11], %13 {strides = array<i32>} : memref<34x32xf32, #tpu.memory_space<vmem>>, vector<16x32xf32>,
    %c17 = arith.constant 17 : index
    %c0_12 = arith.constant 0 : index
    %15 = vector.load %arg6[%c17, %c0_12] : memref<34x32xf32, #tpu.memory_space<vmem>>, vector<1x32xf32>
    tpu.vector_store %arg6[%c17, %c0_12], %10 {strides = array<i32>} : memref<34x32xf32, #tpu.memory_space<vmem>>, vector<1x32xf32>,
    %16 = vector.extract_strided_slice %2 {offsets = [16, 0], sizes = [16, 32], strides = [1, 1]} : vector<32x32xf32> to vector<16x32xf32>
    %17 = arith.addf %16, %7 : vector<16x32xf32>
    %c18 = arith.constant 18 : index
    %c0_13 = arith.constant 0 : index
    %18 = vector.load %arg6[%c18, %c0_13] : memref<34x32xf32, #tpu.memory_space<vmem>>, vector<16x32xf32>
    tpu.vector_store %arg6[%c18, %c0_13], %17 {strides = array<i32>} : memref<34x32xf32, #tpu.memory_space<vmem>>, vector<16x32xf32>,
    return
  }
  func.func @transform_0(%arg0: i32) -> (i32, i32) {
    %c0_i32 = arith.constant 0 : i32
    %c0_i32_0 = arith.constant 0 : i32
    %c0_i32_1 = arith.constant 0 : i32
    return %c0_i32, %c0_i32_0 : i32, i32
  }
  func.func @transform_1(%arg0: i32) -> (i32, i32) {
    %c0_i32 = arith.constant 0 : i32
    %c0_i32_0 = arith.constant 0 : i32
    %c0_i32_1 = arith.constant 0 : i32
    return %c0_i32, %c0_i32_0 : i32, i32
  }
  func.func @transform_2(%arg0: i32) -> (i32, i32) {
    %c0_i32 = arith.constant 0 : i32
    %c0_i32_0 = arith.constant 0 : i32
    %c0_i32_1 = arith.constant 0 : i32
    return %c0_i32, %c0_i32_0 : i32, i32
  }
  func.func @transform_3(%arg0: i32) -> (i32, i32) {
    %c0_i32 = arith.constant 0 : i32
    %c0_i32_0 = arith.constant 0 : i32
    %c0_i32_1 = arith.constant 0 : i32
    return %c0_i32, %c0_i32_0 : i32, i32
  }
  func.func @transform_4(%arg0: i32) -> (i32, i32) {
    %c0_i32 = arith.constant 0 : i32
    %c0_i32_0 = arith.constant 0 : i32
    %c0_i32_1 = arith.constant 0 : i32
    return %c0_i32, %c0_i32_0 : i32, i32
  }
  func.func @transform_5(%arg0: i32) -> (i32, i32) {
    %c0_i32 = arith.constant 0 : i32
    %c0_i32_0 = arith.constant 0 : i32
    %c0_i32_1 = arith.constant 0 : i32
    return %c0_i32, %c0_i32_0 : i32, i32
  }
}

</mosaic_0001>

<llo_original>
// kernel: tpu_custom_call.1
$region0: #{tpu_custom_call.1}
  #allocation0 [shape = 'u32[]', space=smem, size = 0x4, offset = 0x4, fixed_abs, tag = 'smem constant byte address 0x4 - core index']
  #allocation1 [shape = 'u32[72,128]{1,0:T(1,128)}', space=vmem, size = 0x9000, scoped, tag = 'internal scratch']
  %s0 = inlined_call_operand.vmem [shape: f32[32,64], index: 0, kind: input, shape index: {}]
  %s1 = inlined_call_operand.vmem [shape: f32[64,32], index: 1, kind: input, shape index: {}]
  %s2 = inlined_call_operand.vmem [shape: f32[1,32], index: 2, kind: input, shape index: {}]
  %s3 = inlined_call_operand.vmem [shape: f32[1,32], index: 3, kind: input, shape index: {}]
  %s4 = inlined_call_operand.vmem [shape: f32[17,32], index: 4, kind: input, shape index: {}]
  %s5 = inlined_call_operand.vmem [shape: f32[34,32], index: 5, kind: output, shape index: {}]
  %s6 = sld [smem:[#allocation0]]
  $region30: #{tpu_custom_call.1} parent=0
    _
  %s8 = ssub.s32 1, %s6
  %s9 = scalar_select 0, %s8, %s6
  // Predicated region
  $region2: #{tpu_custom_call.1} parent=0 // pred_check
    _
  $region3: #{tpu_custom_call.1} parent=0 // pred_check_branch
    %11 = sbr.rel (0) target = $region5
  $region4: #{tpu_custom_call.1} parent=0 // pred_region
    _
  $region5: #{tpu_custom_call.1} parent=0 // pred_fallthru
    _
  // Predicated region
  $region6: #{tpu_custom_call.1} parent=0 // pred_check
    _
  $region7: #{tpu_custom_call.1} parent=0 // pred_check_branch
    %13 = sbr.rel (0) target = $region9
  $region8: #{tpu_custom_call.1} parent=0 // pred_region
    _
  $region9: #{tpu_custom_call.1} parent=0 // pred_fallthru
    _
  // Predicated region
  $region10: #{tpu_custom_call.1} parent=0 // pred_check
    _
  $region11: #{tpu_custom_call.1} parent=0 // pred_check_branch
    %15 = sbr.rel (0) target = $region13
  $region12: #{tpu_custom_call.1} parent=0 // pred_region
    _
  $region13: #{tpu_custom_call.1} parent=0 // pred_fallthru
    _
  // Predicated region
  $region14: #{tpu_custom_call.1} parent=0 // pred_check
    _
  $region15: #{tpu_custom_call.1} parent=0 // pred_check_branch
    %17 = sbr.rel (0) target = $region17
  $region16: #{tpu_custom_call.1} parent=0 // pred_region
    _
  $region17: #{tpu_custom_call.1} parent=0 // pred_fallthru
    _
  // Predicated region
  $region18: #{tpu_custom_call.1} parent=0 // pred_check
    _
  $region19: #{tpu_custom_call.1} parent=0 // pred_check_branch
    %19 = sbr.rel (0) target = $region21
  $region20: #{tpu_custom_call.1} parent=0 // pred_region
    _
  $region21: #{tpu_custom_call.1} parent=0 // pred_fallthru
    _
  %v20 = vld [vmem:[%s0] sm:$0xff]
  %v21 = vld [vmem:[%s0 + $0x8] sm:$0xff]
  %v22 = vld [vmem:[%s0 + $0x10] sm:$0xff]
  %v23 = vld [vmem:[%s0 + $0x18] sm:$0xff]
  %v24 = vld [vmem:[%s1] sm:$0xff]
  %v25 = vld [vmem:[%s1 + $0x8] sm:$0xff]
  %v26 = vld [vmem:[%s1 + $0x10] sm:$0xff]
  %v27 = vld [vmem:[%s1 + $0x18] sm:$0xff]
  %v28 = vld [vmem:[%s1 + $0x20] sm:$0xff]
  %v29 = vld [vmem:[%s1 + $0x28] sm:$0xff]
  %v30 = vld [vmem:[%s1 + $0x30] sm:$0xff]
  %v31 = vld [vmem:[%s1 + $0x38] sm:$0xff]
  %vm32 = vcmask 523264
  %v34 = vsel %vm32, %v20, 0
  %v37 = vsel %vm32, %v21, 0
  %v40 = vsel %vm32, %v22, 0
  %v43 = vsel %vm32, %v23, 0
  %45 = vmatpush.msra.mxu0 0.0
  %46 = vmatpush.msra.mxu0 0.0
  %47 = vmatpush.msra.mxu0 0.0
  %48 = vmatpush.msra.mxu0 0.0
  %49 = vmatpush.msra.mxu0 0.0
  %50 = vmatpush.msra.mxu0 0.0
  %51 = vmatpush.msra.mxu0 0.0
  %52 = vmatpush.msra.mxu0 0.0
  %53 = vmatpush.msra.mxu0 %v31
  %54 = vmatpush.msra.mxu0 %v30
  %55 = vmatpush.msra.mxu0 %v29
  %56 = vmatpush.msra.mxu0 %v28
  %57 = vmatpush.msra.mxu0 %v27
  %58 = vmatpush.msra.mxu0 %v26
  %59 = vmatpush.msra.mxu0 %v25
  %60 = vmatpush.msra.mxu0 %v24
  %61 = vmatmul.f32.gmra.mxu0 %v34
  %v62 = vpop.f32.mrf.mxu0
  %v63 = vadd.f32 0.0, %v62
  %64 = vmatmul.f32.gmra.mxu0 %v37
  %v65 = vpop.f32.mrf.mxu0
  %v66 = vadd.f32 0.0, %v65
  %67 = vmatmul.f32.gmra.mxu0 %v40
  %v68 = vpop.f32.mrf.mxu0
  %v69 = vadd.f32 0.0, %v68
  %70 = vmatmul.f32.gmra.mxu0 %v43
  %v71 = vpop.f32.mrf.mxu0
  %v72 = vadd.f32 0.0, %v71
  %73 = vdwg.mxu0
  %v74 = vld [vmem:[%s4] sm:$0xff]
  %v75 = vld [vmem:[%s4 + $0x8] sm:$0xff]
  %v76 = vld [vmem:[%s4 + $0x10] sm:$0x1]
  %v77 = vld [vmem:[%s2] sm:$0x1]
  %v79 = vperm.slane %v77, 0
  %v81 = vadd.f32 %v74, %v79
  %v82 = vadd.f32 %v75, %v79
  %v83 = vadd.f32 %v76, %v79
  %v84 = vld [vmem:[%s3] sm:$0x1]
  %v85 = vadd.f32 %v84, %v74
  %vm86 = vcmask 253952
  %87 = vst.msk [vmem:[%s5] sm:$0x1] %vm86, %v85
  %vm91 = vcmask 1046528
  %v92 = vrot.slane %v81, 1
  %v93 = vrot.slane %v82, 1
  %v94 = vsel %vm91, %v92, %v93
  %v95 = vrot.slane %v83, 1
  %v96 = vsel %vm91, %v93, %v95
  %v99 = vadd.f32 %v63, %v94
  %v100 = vadd.f32 %v66, %v96
  %vm101 = vcmask 261120
  %102 = vst.msk [vmem:[%s5 + $0x1] sm:$0xff] %vm101, %v99
  %103 = vst.msk [vmem:[%s5 + $0x9] sm:$0xff] %vm101, %v100
  %104 = vst.msk [vmem:[%s5 + $0x11] sm:$0x1] %vm86, %v85
  %v105 = vadd.f32 %v69, %v94
  %v106 = vadd.f32 %v72, %v96
  %107 = vst.msk [vmem:[%s5 + $0x12] sm:$0xff] %vm101, %v105
  %108 = vst.msk [vmem:[%s5 + $0x1a] sm:$0xff] %vm101, %v106
  // Predicated region
  $region22: #{tpu_custom_call.1} parent=0 // pred_check
    _
  $region23: #{tpu_custom_call.1} parent=0 // pred_check_branch
    %110 = sbr.rel (0) target = $region25
  $region24: #{tpu_custom_call.1} parent=0 // pred_region
    _
  $region25: #{tpu_custom_call.1} parent=0 // pred_fallthru
    _
  // Predicated region
  $region26: #{tpu_custom_call.1} parent=0 // pred_check
    _
  $region27: #{tpu_custom_call.1} parent=0 // pred_check_branch
    %112 = sbr.rel (0) target = $region29
  $region28: #{tpu_custom_call.1} parent=0 // pred_region
    _
  $region29: #{tpu_custom_call.1} parent=0 // pred_fallthru
    _

</llo_original>
